<compile_context>
chip_gen: v6e
topology: v6e:2x2x1
jax: 0.10.0
libtpu: 0.0.40
codegen_flags: <defaults>
</compile_context>

<pallas_src>
import functools

import jax
import jax.numpy as jnp
from jax import lax
from jax.experimental import pallas as pl
from jax.experimental.pallas import tpu as pltpu


def _pair(v):
    return tuple(v) if isinstance(v, (tuple, list)) else (v, v)


def _quadruple(v):
    return tuple(v) if isinstance(v, (tuple, list)) else (v, v, v, v)


# ----------------------------------------------------------------------------
# Median selection networks (pure VPU min/max, elementwise over strip tiles).
# ----------------------------------------------------------------------------
def _cmp_exchange(a, b):
    return jnp.minimum(a, b), jnp.maximum(a, b)


def _median_of_9(v):
    """Median of 9 equal-shape arrays via the 19-exchange Paeth/Devillard
    median-of-9 network with dead compare halves pruned (~30 min/max ops)."""
    p = list(v)
    p[1], p[2] = _cmp_exchange(p[1], p[2])
    p[4], p[5] = _cmp_exchange(p[4], p[5])
    p[7], p[8] = _cmp_exchange(p[7], p[8])
    p[0], p[1] = _cmp_exchange(p[0], p[1])
    p[3], p[4] = _cmp_exchange(p[3], p[4])
    p[6], p[7] = _cmp_exchange(p[6], p[7])
    p[1], p[2] = _cmp_exchange(p[1], p[2])
    p[4], p[5] = _cmp_exchange(p[4], p[5])
    p[7], p[8] = _cmp_exchange(p[7], p[8])
    p[3] = jnp.maximum(p[0], p[3])            # (0,3): max half only
    p[5] = jnp.minimum(p[5], p[8])            # (5,8): min half only
    p[4], p[7] = _cmp_exchange(p[4], p[7])    # (4,7): both halves live
    p[6] = jnp.maximum(p[3], p[6])            # (3,6): max half only
    p[4] = jnp.maximum(p[1], p[4])            # (1,4): max half only
    p[2] = jnp.minimum(p[2], p[5])            # (2,5): min half only
    p[4] = jnp.minimum(p[4], p[7])            # (4,7): min half only
    p[4], p[2] = _cmp_exchange(p[4], p[2])    # (4,2): both halves live
    p[4] = jnp.maximum(p[6], p[4])            # (6,4): max half only
    return jnp.minimum(p[4], p[2])            # (4,2): min half only -> median


def _select_rank(vals, rank):
    """Element of rank `rank` (0 = smallest) via a pruned partial bubble
    network: only positions >= rank are settled; last pass keeps max halves.
    # TODO(synk): replace with a Batcher-based partial selection for kh*kw>9.
    """
    v = list(vals)
    n = len(v)
    n_pass = n - rank
    for p in range(n_pass):
        last = p == n_pass - 1
        for j in range(n - 1 - p):
            if last:
                v[j + 1] = jnp.maximum(v[j], v[j + 1])
            else:
                v[j], v[j + 1] = _cmp_exchange(v[j], v[j + 1])
    return v[rank]


# ----------------------------------------------------------------------------
# Kernel: one grid step = a block of BNC planes (NCHW layout, W on lanes).
# Compute is strip-mined over output rows so intermediates stay in vregs.
# ----------------------------------------------------------------------------
def _median_pool_kernel(x_ref, o_ref, *scratch, kh, kw, sh, sw, pads, ho, wo,
                        med_idx, row_chunk, compute_dtype):
    p_l, p_r, p_t, p_b = pads
    has_pad = any(pads)

    if has_pad:
        # In-kernel reflect padding (edge excluded, identical to F.pad
        # 'reflect'); written once to a VMEM scratch so the strip loop can
        # slice it with dynamic row offsets.  Requires pad < dim.
        pad_ref = scratch[0]
        x = x_ref[...].astype(compute_dtype)          # (bnc, h, w)
        h, w = x.shape[1], x.shape[2]
        if p_t or p_b:
            rows = [x[:, i:i + 1, :] for i in range(p_t, 0, -1)]
            rows.append(x)
            rows += [x[:, h - 1 - i:h - i, :] for i in range(1, p_b + 1)]
            x = jnp.concatenate(rows, axis=1)
        if p_l or p_r:
            cols = [x[:, :, j:j + 1] for j in range(p_l, 0, -1)]
            cols.append(x)
            cols += [x[:, :, w - 1 - j:w - j] for j in range(1, p_r + 1)]
            x = jnp.concatenate(cols, axis=2)
        pad_ref[...] = x
        src = pad_ref
    else:
        src = x_ref

    in_rows = (row_chunk - 1) * sh + kh
    n_chunks = -(-ho // row_chunk)                    # static

    def chunk_body(ci, carry):
        # Clamp the last strip so it overlaps (recompute) instead of running
        # out of bounds when ho is not a multiple of row_chunk.
        r0 = jnp.minimum(ci * row_chunk, ho - row_chunk)
        xin = src[:, pl.ds(r0 * sh, in_rows), :].astype(compute_dtype)
        bnc = xin.shape[0]
        # kh*kw window taps of this strip only -> a few vregs each, so the
        # whole selection network lives in registers (no VMEM round trips).
        taps = []
        for di in range(kh):
            for dj in range(kw):
                taps.append(
                    lax.slice(
                        xin,
                        (0, di, dj),
                        (bnc, di + (row_chunk - 1) * sh + 1,
                         dj + (wo - 1) * sw + 1),
                        (1, sh, sw),
                    ))
        if len(taps) == 9 and med_idx == 4:
            med = _median_of_9(taps)
        else:
            med = _select_rank(taps, med_idx)        # lower median (torch)
        o_ref[:, pl.ds(r0, row_chunk), :] = med.astype(o_ref.dtype)
        return carry

    lax.fori_loop(0, n_chunks, chunk_body, 0, unroll=bool(n_chunks <= 8))


# ----------------------------------------------------------------------------
# Block sizing / dtype selection.
# ----------------------------------------------------------------------------
def _compute_dtype(dtype):
    """bf16 compute on v6e/v7x (bf16 VALU, packed vregs); f32 upcast on
    older chips (v5e has no bf16 VALU -> converts around every compare)."""
    d = jnp.dtype(dtype)
    if d != jnp.dtype(jnp.bfloat16):
        return d
    try:
        kind = jax.devices()[0].device_kind.lower()
    except Exception:
        return d
    if ("v6" in kind) or ("v7" in kind) or ("7x" in kind):
        return d
    return jnp.dtype(jnp.float32)


def _pick_nc_block(nc, h, w, hp, wp, ho, wo, kh, kw, itemsize, citemsize,
                   has_pad):
    """Planes (flattened N*C) per grid step."""
    # (a) VMEM: double-buffered in/out blocks + padded scratch + concat
    #     temporaries stay around ~6 MiB -> many small steps, good overlap.
    per_plane = itemsize * (2 * h * w + 2 * ho * wo)
    if has_pad:
        per_plane += 3 * citemsize * hp * wp
    vmem_cap = max(1, (6 * 1024 * 1024) // max(per_plane, 1))
    # (b) vreg working set: kh*kw taps (+ a few temps) of one 8-row strip per
    #     plane must fit the 64-entry register file (avoid spills).
    lane_groups = -(-wo // 128)
    reg_cap = max(1, 48 // max(1, (kh * kw + 4) * lane_groups))
    # (c) >= 2 grid steps whenever possible (pipelining + both v7x cores).
    cap = max(1, min(vmem_cap, reg_cap, nc if nc < 2 else max(1, nc // 2)))
    # Largest divisor of nc that is <= cap (exact tiling, no ragged block).
    best = 1
    for d in range(1, min(cap, nc) + 1):
        if nc % d == 0:
            best = d
    return best


# ----------------------------------------------------------------------------
# Module wrapper (JAX/Pallas port of the PyTorch MedianPool2d).
# ----------------------------------------------------------------------------
class MedianPool2d:
    def __init__(self, kernel_size=3, stride=1, padding=0, same=False):
        self.k = _pair(kernel_size)
        self.stride = _pair(stride)
        self.padding = _quadruple(padding)  # (left, right, top, bottom)
        self.same = same

    def _padding(self, x):
        if self.same:
            ih, iw = x.shape[2:]
            if ih % self.stride[0] == 0:
                ph = max(self.k[0] - self.stride[0], 0)
            else:
                ph = max(self.k[0] - ih % self.stride[0], 0)
            if iw % self.stride[1] == 0:
                pw = max(self.k[1] - self.stride[1], 0)
            else:
                pw = max(self.k[1] - iw % self.stride[1], 0)
            p_l = pw // 2
            p_r = pw - p_l
            p_t = ph // 2
            p_b = ph - p_t
            padding = (p_l, p_r, p_t, p_b)
        else:
            padding = self.padding
        return padding

    def __call__(self, x):
        n, c, h, w = x.shape
        p_l, p_r, p_t, p_b = self._padding(x)
        kh, kw = self.k
        sh, sw = self.stride
        hp, wp = h + p_t + p_b, w + p_l + p_r
        ho = (hp - kh) // sh + 1
        wo = (wp - kw) // sw + 1
        med_idx = (kh * kw - 1) // 2          # LOWER median, matches torch
        nc = n * c
        has_pad = any((p_l, p_r, p_t, p_b))

        compute_dtype = _compute_dtype(x.dtype)
        itemsize = jnp.dtype(x.dtype).itemsize
        citemsize = jnp.dtype(compute_dtype).itemsize

        row_chunk = max(1, min(ho, 8))
        bnc = _pick_nc_block(nc, h, w, hp, wp, ho, wo, kh, kw,
                             itemsize, citemsize, has_pad)
        grid = (nc // bnc,)
        # TODO(synk): add a spatial-H grid axis with a (kh-1)-row halo (manual
        # DMA) for the case nc == 1 with very large H*W planes.

        # NCHW consumed directly: (N, C, H, W) -> (N*C, H, W) is a free
        # contiguous reshape (no HBM transpose passes).
        x_r = x.reshape(nc, h, w)

        scratch_shapes = []
        if has_pad:
            scratch_shapes.append(pltpu.VMEM((bnc, hp, wp), compute_dtype))

        kernel = functools.partial(
            _median_pool_kernel,
            kh=kh, kw=kw, sh=sh, sw=sw,
            pads=(p_l, p_r, p_t, p_b), ho=ho, wo=wo, med_idx=med_idx,
            row_chunk=row_chunk, compute_dtype=compute_dtype,
        )

        out = pl.pallas_call(
            kernel,
            out_shape=jax.ShapeDtypeStruct((nc, ho, wo), x.dtype),
            grid_spec=pltpu.PrefetchScalarGridSpec(
                num_scalar_prefetch=0,
                grid=grid,
                in_specs=[pl.BlockSpec((bnc, h, w), lambda i: (i, 0, 0))],
                out_specs=pl.BlockSpec((bnc, ho, wo), lambda i: (i, 0, 0)),
                scratch_shapes=scratch_shapes,
            ),
            compiler_params=pltpu.CompilerParams(
                dimension_semantics=("parallel",),
                vmem_limit_bytes=32 * 1024 * 1024,
            ),
        )(x_r)

        # Back to NCHW (free contiguous reshape).
        return out.reshape(n, c, ho, wo)


# ----------------------------------------------------------------------------
# Pure-JAX reference (mirrors the torch forward) for correctness checking.
# ----------------------------------------------------------------------------
def _median_pool_ref(x, kernel_size=3, stride=1, padding=0, same=False):
    mod = MedianPool2d(kernel_size, stride, padding, same)
    p_l, p_r, p_t, p_b = mod._padding(x)
    xp = jnp.pad(x, ((0, 0), (0, 0), (p_t, p_b), (p_l, p_r)), mode="reflect")
    kh, kw = mod.k
    sh, sw = mod.stride
    hp, wp = xp.shape[2], xp.shape[3]
    ho = (hp - kh) // sh + 1
    wo = (wp - kw) // sw + 1
    patches = []
    for di in range(kh):
        for dj in range(kw):
            patches.append(
                xp[:, :, di: di + (ho - 1) * sh + 1: sh,
                         dj: dj + (wo - 1) * sw + 1: sw]
            )
    stacked = jnp.stack(patches, axis=-1)        # (N, C, Ho, Wo, kh*kw)
    sorted_vals = jnp.sort(stacked, axis=-1)
    return sorted_vals[..., (kh * kw - 1) // 2]


if __name__ == "__main__":
    key = jax.random.PRNGKey(0)
    x = jax.random.normal(key, (2, 4, 16, 16), dtype=jnp.float32)

    # Default module config: kernel_size=3, stride=1, padding=0, same=False.
    pool = MedianPool2d(kernel_size=3, stride=1, padding=0, same=False)
    out = jax.block_until_ready(pool(x))
    ref = _median_pool_ref(x, kernel_size=3, stride=1, padding=0, same=False)
    assert out.shape == (2, 4, 14, 14), out.shape
    assert jnp.allclose(out, ref, atol=1e-6, rtol=1e-6), "mismatch vs reference"

    # Also exercise the `same=True` padding path (in-kernel reflect pad).
    pool_same = MedianPool2d(kernel_size=3, stride=1, same=True)
    out_same = jax.block_until_ready(pool_same(x))
    ref_same = _median_pool_ref(x, kernel_size=3, stride=1, same=True)
    assert out_same.shape == (2, 4, 16, 16), out_same.shape
    assert jnp.allclose(out_same, ref_same, atol=1e-6, rtol=1e-6), "mismatch (same=True)"

    print("KERNEL_OK")
</pallas_src>

<mosaic_0001>
module attributes {stable_mosaic.version = 11 : i64} {
  func.func @_median_pool_kernel(%arg0: i32, %arg1: memref<2x16x16xf32, #tpu.memory_space<vmem>>, %arg2: memref<2x14x14xf32, #tpu.memory_space<vmem>>) attributes {dimension_semantics = [#tpu.dimension_semantics<parallel>], iteration_bounds = array<i64: 4>, scalar_prefetch = 0 : i64, scratch_operands = 0 : i64, tpu.core_type = #tpu.core_type<tc>, window_params = [{transform_indices = @transform_0, window_bounds = array<i64: 2, 16, 16>}, {transform_indices = @transform_1, window_bounds = array<i64: 2, 14, 14>}]} {
    %c0_i32 = arith.constant 0 : i32
    %c8_i32 = arith.constant 8 : i32
    %0 = arith.muli %c0_i32, %c8_i32 : i32
    %c6_i32 = arith.constant 6 : i32
    %1 = arith.minsi %0, %c6_i32 : i32
    %c1_i32 = arith.constant 1 : i32
    %2 = arith.muli %1, %c1_i32 : i32
    %c0 = arith.constant 0 : index
    %3 = arith.index_cast %2 : i32 to index
    %c0_0 = arith.constant 0 : index
    %4 = vector.load %arg1[%c0, %3, %c0_0] : memref<2x16x16xf32, #tpu.memory_space<vmem>>, vector<2x10x16xf32>
    %5 = vector.extract_strided_slice %4 {offsets = [0, 0, 0], sizes = [2, 8, 14], strides = [1, 1, 1]} : vector<2x10x16xf32> to vector<2x8x14xf32>
    %6 = vector.extract_strided_slice %4 {offsets = [0, 0, 1], sizes = [2, 8, 14], strides = [1, 1, 1]} : vector<2x10x16xf32> to vector<2x8x14xf32>
    %7 = vector.extract_strided_slice %4 {offsets = [0, 0, 2], sizes = [2, 8, 14], strides = [1, 1, 1]} : vector<2x10x16xf32> to vector<2x8x14xf32>
    %8 = vector.extract_strided_slice %4 {offsets = [0, 1, 0], sizes = [2, 8, 14], strides = [1, 1, 1]} : vector<2x10x16xf32> to vector<2x8x14xf32>
    %9 = vector.extract_strided_slice %4 {offsets = [0, 1, 1], sizes = [2, 8, 14], strides = [1, 1, 1]} : vector<2x10x16xf32> to vector<2x8x14xf32>
    %10 = vector.extract_strided_slice %4 {offsets = [0, 1, 2], sizes = [2, 8, 14], strides = [1, 1, 1]} : vector<2x10x16xf32> to vector<2x8x14xf32>
    %11 = vector.extract_strided_slice %4 {offsets = [0, 2, 0], sizes = [2, 8, 14], strides = [1, 1, 1]} : vector<2x10x16xf32> to vector<2x8x14xf32>
    %12 = vector.extract_strided_slice %4 {offsets = [0, 2, 1], sizes = [2, 8, 14], strides = [1, 1, 1]} : vector<2x10x16xf32> to vector<2x8x14xf32>
    %13 = vector.extract_strided_slice %4 {offsets = [0, 2, 2], sizes = [2, 8, 14], strides = [1, 1, 1]} : vector<2x10x16xf32> to vector<2x8x14xf32>
    %14 = arith.minimumf %6, %7 : vector<2x8x14xf32>
    %15 = arith.maximumf %6, %7 : vector<2x8x14xf32>
    %16 = arith.minimumf %9, %10 : vector<2x8x14xf32>
    %17 = arith.maximumf %9, %10 : vector<2x8x14xf32>
    %18 = arith.minimumf %12, %13 : vector<2x8x14xf32>
    %19 = arith.maximumf %12, %13 : vector<2x8x14xf32>
    %20 = arith.minimumf %5, %14 : vector<2x8x14xf32>
    %21 = arith.maximumf %5, %14 : vector<2x8x14xf32>
    %22 = arith.minimumf %8, %16 : vector<2x8x14xf32>
    %23 = arith.maximumf %8, %16 : vector<2x8x14xf32>
    %24 = arith.minimumf %11, %18 : vector<2x8x14xf32>
    %25 = arith.maximumf %11, %18 : vector<2x8x14xf32>
    %26 = arith.minimumf %21, %15 : vector<2x8x14xf32>
    %27 = arith.maximumf %21, %15 : vector<2x8x14xf32>
    %28 = arith.minimumf %23, %17 : vector<2x8x14xf32>
    %29 = arith.maximumf %23, %17 : vector<2x8x14xf32>
    %30 = arith.minimumf %25, %19 : vector<2x8x14xf32>
    %31 = arith.maximumf %25, %19 : vector<2x8x14xf32>
    %32 = arith.maximumf %20, %22 : vector<2x8x14xf32>
    %33 = arith.minimumf %29, %31 : vector<2x8x14xf32>
    %34 = arith.minimumf %28, %30 : vector<2x8x14xf32>
    %35 = arith.maximumf %28, %30 : vector<2x8x14xf32>
    %36 = arith.maximumf %32, %24 : vector<2x8x14xf32>
    %37 = arith.maximumf %26, %34 : vector<2x8x14xf32>
    %38 = arith.minimumf %27, %33 : vector<2x8x14xf32>
    %39 = arith.minimumf %37, %35 : vector<2x8x14xf32>
    %40 = arith.minimumf %39, %38 : vector<2x8x14xf32>
    %41 = arith.maximumf %39, %38 : vector<2x8x14xf32>
    %42 = arith.maximumf %36, %40 : vector<2x8x14xf32>
    %43 = arith.minimumf %42, %41 : vector<2x8x14xf32>
    %c0_1 = arith.constant 0 : index
    %44 = arith.index_cast %1 : i32 to index
    %c0_2 = arith.constant 0 : index
    %45 = vector.load %arg2[%c0_1, %44, %c0_2] : memref<2x14x14xf32, #tpu.memory_space<vmem>>, vector<2x8x14xf32>
    tpu.vector_store %arg2[%c0_1, %44, %c0_2], %43 {strides = array<i32>} : memref<2x14x14xf32, #tpu.memory_space<vmem>>, vector<2x8x14xf32>,
    %c1_i32_3 = arith.constant 1 : i32
    %c8_i32_4 = arith.constant 8 : i32
    %46 = arith.muli %c1_i32_3, %c8_i32_4 : i32
    %c6_i32_5 = arith.constant 6 : i32
    %47 = arith.minsi %46, %c6_i32_5 : i32
    %c1_i32_6 = arith.constant 1 : i32
    %48 = arith.muli %47, %c1_i32_6 : i32
    %c0_7 = arith.constant 0 : index
    %49 = arith.index_cast %48 : i32 to index
    %c0_8 = arith.constant 0 : index
    %50 = vector.load %arg1[%c0_7, %49, %c0_8] : memref<2x16x16xf32, #tpu.memory_space<vmem>>, vector<2x10x16xf32>
    %51 = vector.extract_strided_slice %50 {offsets = [0, 0, 0], sizes = [2, 8, 14], strides = [1, 1, 1]} : vector<2x10x16xf32> to vector<2x8x14xf32>
    %52 = vector.extract_strided_slice %50 {offsets = [0, 0, 1], sizes = [2, 8, 14], strides = [1, 1, 1]} : vector<2x10x16xf32> to vector<2x8x14xf32>
    %53 = vector.extract_strided_slice %50 {offsets = [0, 0, 2], sizes = [2, 8, 14], strides = [1, 1, 1]} : vector<2x10x16xf32> to vector<2x8x14xf32>
    %54 = vector.extract_strided_slice %50 {offsets = [0, 1, 0], sizes = [2, 8, 14], strides = [1, 1, 1]} : vector<2x10x16xf32> to vector<2x8x14xf32>
    %55 = vector.extract_strided_slice %50 {offsets = [0, 1, 1], sizes = [2, 8, 14], strides = [1, 1, 1]} : vector<2x10x16xf32> to vector<2x8x14xf32>
    %56 = vector.extract_strided_slice %50 {offsets = [0, 1, 2], sizes = [2, 8, 14], strides = [1, 1, 1]} : vector<2x10x16xf32> to vector<2x8x14xf32>
    %57 = vector.extract_strided_slice %50 {offsets = [0, 2, 0], sizes = [2, 8, 14], strides = [1, 1, 1]} : vector<2x10x16xf32> to vector<2x8x14xf32>
    %58 = vector.extract_strided_slice %50 {offsets = [0, 2, 1], sizes = [2, 8, 14], strides = [1, 1, 1]} : vector<2x10x16xf32> to vector<2x8x14xf32>
    %59 = vector.extract_strided_slice %50 {offsets = [0, 2, 2], sizes = [2, 8, 14], strides = [1, 1, 1]} : vector<2x10x16xf32> to vector<2x8x14xf32>
    %60 = arith.minimumf %52, %53 : vector<2x8x14xf32>
    %61 = arith.maximumf %52, %53 : vector<2x8x14xf32>
    %62 = arith.minimumf %55, %56 : vector<2x8x14xf32>
    %63 = arith.maximumf %55, %56 : vector<2x8x14xf32>
    %64 = arith.minimumf %58, %59 : vector<2x8x14xf32>
    %65 = arith.maximumf %58, %59 : vector<2x8x14xf32>
    %66 = arith.minimumf %51, %60 : vector<2x8x14xf32>
    %67 = arith.maximumf %51, %60 : vector<2x8x14xf32>
    %68 = arith.minimumf %54, %62 : vector<2x8x14xf32>
    %69 = arith.maximumf %54, %62 : vector<2x8x14xf32>
    %70 = arith.minimumf %57, %64 : vector<2x8x14xf32>
    %71 = arith.maximumf %57, %64 : vector<2x8x14xf32>
    %72 = arith.minimumf %67, %61 : vector<2x8x14xf32>
    %73 = arith.maximumf %67, %61 : vector<2x8x14xf32>
    %74 = arith.minimumf %69, %63 : vector<2x8x14xf32>
    %75 = arith.maximumf %69, %63 : vector<2x8x14xf32>
    %76 = arith.minimumf %71, %65 : vector<2x8x14xf32>
    %77 = arith.maximumf %71, %65 : vector<2x8x14xf32>
    %78 = arith.maximumf %66, %68 : vector<2x8x14xf32>
    %79 = arith.minimumf %75, %77 : vector<2x8x14xf32>
    %80 = arith.minimumf %74, %76 : vector<2x8x14xf32>
    %81 = arith.maximumf %74, %76 : vector<2x8x14xf32>
    %82 = arith.maximumf %78, %70 : vector<2x8x14xf32>
    %83 = arith.maximumf %72, %80 : vector<2x8x14xf32>
    %84 = arith.minimumf %73, %79 : vector<2x8x14xf32>
    %85 = arith.minimumf %83, %81 : vector<2x8x14xf32>
    %86 = arith.minimumf %85, %84 : vector<2x8x14xf32>
    %87 = arith.maximumf %85, %84 : vector<2x8x14xf32>
    %88 = arith.maximumf %82, %86 : vector<2x8x14xf32>
    %89 = arith.minimumf %88, %87 : vector<2x8x14xf32>
    %c0_9 = arith.constant 0 : index
    %90 = arith.index_cast %47 : i32 to index
    %c0_10 = arith.constant 0 : index
    %91 = vector.load %arg2[%c0_9, %90, %c0_10] : memref<2x14x14xf32, #tpu.memory_space<vmem>>, vector<2x8x14xf32>
    tpu.vector_store %arg2[%c0_9, %90, %c0_10], %89 {strides = array<i32>} : memref<2x14x14xf32, #tpu.memory_space<vmem>>, vector<2x8x14xf32>,
    %c2_i32 = arith.constant 2 : i32
    return
  }
  func.func @transform_0(%arg0: i32) -> (i32, i32, i32) {
    %c0_i32 = arith.constant 0 : i32
    %c0_i32_0 = arith.constant 0 : i32
    %c0_i32_1 = arith.constant 0 : i32
    return %arg0, %c0_i32, %c0_i32_0 : i32, i32, i32
  }
  func.func @transform_1(%arg0: i32) -> (i32, i32, i32) {
    %c0_i32 = arith.constant 0 : i32
    %c0_i32_0 = arith.constant 0 : i32
    %c0_i32_1 = arith.constant 0 : i32
    return %arg0, %c0_i32, %c0_i32_0 : i32, i32, i32
  }
}

</mosaic_0001>

<llo_original>
// kernel: tpu_custom_call.1
$region0: #{tpu_custom_call.1}
  #allocation0 [shape = 'u32[]', space=smem, size = 0x4, offset = 0x4, fixed_abs, tag = 'smem constant byte address 0x4 - core index']
  #allocation1 [shape = 'u32[144,128]{1,0:T(1,128)}', space=vmem, size = 0x12000, scoped, tag = 'internal scratch']
  %s0 = inlined_call_operand.hbm [shape: f32[8,16,16], index: 0, kind: input, shape index: {}]
  %s1 = inlined_call_operand.vmem [shape: f32[8,14,14], index: 1, kind: output, shape index: {}]
  %s2 = sld [smem:[#allocation0]]
  $region41: #{tpu_custom_call.1} parent=0
    _
  %s4 = ssub.s32 1, %s2
  %s5 = scalar_select 0, %s4, %s2
  $region1: #{tpu_custom_call.1} parent=0
    #allocation2 [shape = 'u8[32768]{0}', space=vmem, size = 0x8000, scoped, tag = 'input window, operand 0']
    #allocation3 [shape = 's32[2]{0}', space=sflag, size = 0x8, scoped, tag = 'scoped memory for tpu_custom_call.1']
    %6 = vsyncpa [#allocation3], 0
    %s7 = scalar_lea.sflag [#allocation3], 1
    %8 = vsyncpa %s7, 0
    loop: start=0, step=1, limit=6
    $region2: #{tpu_custom_call.1} parent=1 // loop_pre_header
      _
    $region3: #{tpu_custom_call.1} parent=1 // loop_header
      %s10 = sphi 0, %s14
      %p11 = scmp.ge.s32.totalorder %s10, 6
      %s20 = sphi 0, %s22
      %s23 = sphi 0, %s20
      %s24 = sphi 0, %s23
      %s40 = sphi 0, %s24
      %s46 = sphi 0, %s48
      %s49 = sphi 0, %s46
      %s50 = sphi 0, %s49
      %s66 = sphi 0, %s50
    $region4: #{tpu_custom_call.1} parent=1 // loop_header_branch
      %13 = sbr.rel (%p11) target = $region8
    $region5: #{tpu_custom_call.1} parent=1 // loop_body
      %s15 = ssub.s32 %s10, 1
      %s16 = ssub.s32 %s10, 2
      %s17 = sadd.s32 %s10, 1
      %s18 = ssub.s32 %s10, %s17
      %p19 = scmp.eq.s32.totalorder %s18, 0
      %s21 = sadd.s32 %s20, 1
      %s22 = scalar_select %p19, %s20, %s21
      %p25 = pneg %p19
      %p26 = scmp.eq.s32.totalorder %s10, 3
      %p27 = por %p25, %p26
      %p28 = scmp.ne.s32.totalorder %s20, %s23
      %p29 = scmp.eq.s32.totalorder %s10, 0
      %p30 = por %p28, %p29
      %p31 = scmp.ne.s32.totalorder %s20, %s23
      %p32 = scmp.eq.s32.totalorder %s15, 3
      %p33 = por %p31, %p32
      %p34 = scmp.ne.s32.totalorder %s23, %s24
      %p35 = scmp.eq.s32.totalorder %s15, 0
      %p36 = por %p34, %p35
      %p37 = scmp.ne.s32.totalorder %s23, %s24
      %p38 = scmp.eq.s32.totalorder %s16, 3
      %p39 = por %p37, %p38
      %p41 = scmp.ne.s32.totalorder %s24, %s40
      %p42 = scmp.eq.s32.totalorder %s16, 0
      %p43 = por %p41, %p42
      %s44 = ssub.s32 %s10, %s17
      %p45 = scmp.eq.s32.totalorder %s44, 0
      %s47 = sadd.s32 %s46, 1
      %s48 = scalar_select %p45, %s46, %s47
      %p51 = pneg %p45
      %p52 = scmp.eq.s32.totalorder %s10, 3
      %p53 = por %p51, %p52
      %p54 = scmp.ne.s32.totalorder %s46, %s49
      %p55 = scmp.eq.s32.totalorder %s10, 0
      %p56 = por %p54, %p55
      %p57 = scmp.ne.s32.totalorder %s46, %s49
      %p58 = scmp.eq.s32.totalorder %s15, 3
      %p59 = por %p57, %p58
      %p60 = scmp.ne.s32.totalorder %s49, %s50
      %p61 = scmp.eq.s32.totalorder %s15, 0
      %p62 = por %p60, %p61
      %p63 = scmp.ne.s32.totalorder %s49, %s50
      %p64 = scmp.eq.s32.totalorder %s16, 3
      %p65 = por %p63, %p64
      %p67 = scmp.ne.s32.totalorder %s50, %s66
      %p68 = scmp.eq.s32.totalorder %s16, 0
      %p69 = por %p67, %p68
      %p70 = scmp.le.s32.totalorder 1, %s10
      %p71 = scmp.lt.s32.totalorder %s10, 5
      %p72 = pnand %p70, %p71
      %p73 = pneg %p72
      // Predicated region
      $region9: #{tpu_custom_call.1} parent=5 // pred_check
        _
      $region10: #{tpu_custom_call.1} parent=5 // pred_check_branch
        %75 = sbr.rel (%p72) target = $region12
      $region11: #{tpu_custom_call.1} parent=5 // pred_region
        %s76 = ssub.s32 %s10, 1
      $region12: #{tpu_custom_call.1} parent=5 // pred_fallthru
        _
      %p77 = scmp.lt.s32.totalorder %s10, 4
      // Predicated region
      $region13: #{tpu_custom_call.1} parent=5 // pred_check
        %p78 = pneg %p77
      $region14: #{tpu_custom_call.1} parent=5 // pred_check_branch
        %80 = sbr.rel (%p78) target = $region16
      $region15: #{tpu_custom_call.1} parent=5 // pred_region
        // Predicated region
        $region17: #{tpu_custom_call.1} parent=15 // pred_check
          %p81 = pneg %p30
        $region18: #{tpu_custom_call.1} parent=15 // pred_check_branch
          %83 = sbr.rel (%p81) target = $region20
        $region19: #{tpu_custom_call.1} parent=15 // pred_region
          %s84 = sand.u32 %s20, 1
          %s85 = scalar_lea.sflag [#allocation3], %s84
          %s86 = sand.u32 %s20, 1
          %s87 = smul.addr %s86, 32
          %s88 = scalar_lea.vmem [#allocation2], %s87
          %s89 = smul.u32 2, %s10
          %s91 = ssub.s32 512, 512
          %92 = vsyncadd %s85, %s91
          %s93 = smul.addr %s89, 2
          %s94 = smul.addr %s93, 128
          %s95 = scalar_lea.hbm %s0, %s94
          %s96 = sshll.u32 %s88, 4
          %s97 = int_to_ptr.vmem [resolvable:$true] %s96
          %102 = dma.hbm_to_vmem [thread:$0]  %s95, 512, %s97, %s85, 128, 128, 8
        $region20: #{tpu_custom_call.1} parent=15 // pred_fallthru
          _
      $region16: #{tpu_custom_call.1} parent=5 // pred_fallthru
        _
      %p103 = scmp.le.s32.totalorder 1, %s10
      %p104 = scmp.lt.s32.totalorder %s10, 5
      %p105 = pnand %p103, %p104
      %p106 = pneg %p105
      // Predicated region
      $region21: #{tpu_custom_call.1} parent=5 // pred_check
        _
      $region22: #{tpu_custom_call.1} parent=5 // pred_check_branch
        %108 = sbr.rel (%p105) target = $region24
      $region23: #{tpu_custom_call.1} parent=5 // pred_region
        %s109 = ssub.s32 %s10, 1
        %s110 = sand.u32 %s23, 1
        %s111 = scalar_lea.sflag [#allocation3], %s110
        %s112 = sand.u32 %s23, 1
        %s113 = smul.addr %s112, 32
        %s114 = scalar_lea.vmem [#allocation2], %s113
        // Predicated region
        $region25: #{tpu_custom_call.1} parent=23 // pred_check
          %p115 = pneg %p36
        $region26: #{tpu_custom_call.1} parent=23 // pred_check_branch
          %117 = sbr.rel (%p115) target = $region28
        $region27: #{tpu_custom_call.1} parent=23 // pred_region
          %118 = dma.done %s111, 512
        $region28: #{tpu_custom_call.1} parent=23 // pred_fallthru
          _
        %s119 = sand.u32 %s23, 1
        %s120 = scalar_lea.sflag [#allocation3], %s119
        %s121 = sand.u32 %s23, 1
        %s122 = smul.addr %s121, 32
        %s123 = scalar_lea.vmem [#allocation2], %s122
        %p124 = pneg %p36
        %p125 = pneg %p33
        %p126 = pneg %p62
        %p127 = pneg %p59
        %s128 = smul.u32 2, %s15
        %p129 = scmp.lt.s32.totalorder %s128, 7
        %s130 = scalar_select %p129, %s128, 7
        %s131 = smul.addr %s130, 2
        %s132 = smul.addr %s131, 8
        %s133 = scalar_lea.vmem %s1, %s132
        %s134 = smul.u32 2, %s15
        %s135 = smul.u32 2, %s15
        %p136 = scmp.lt.s32.totalorder %s135, 7
        %s137 = scalar_select %p136, %s135, 7
        %s138 = smul.addr %s137, 2
        %s139 = smul.addr %s138, 8
        %s140 = scalar_lea.vmem %s1, %s139
        %s141 = smul.u32 2, %s15
        %v142 = vld [vmem:[%s114] sm:$0xff]
        %v143 = vld [vmem:[%s114 + $0x8] sm:$0x3]
        %v144 = vld [vmem:[%s114 + $0x10] sm:$0xff]
        %v145 = vld [vmem:[%s114 + $0x18] sm:$0x3]
        %148 = vrot.lane.b32.xlu0 %v142, 127
        %v149 = vpop.permute.xlu0 %148
        %150 = vrot.lane.b32.xlu0 %v144, 127
        %v151 = vpop.permute.xlu0 %150
        %v154 = vmin.f32 %v142, %v149
        %v155 = vmin.f32 %v144, %v151
        %v156 = vmax.f32 %v142, %v149
        %v157 = vmax.f32 %v144, %v151
        %160 = vrot.lane.b32.xlu0 %v143, 127
        %v161 = vpop.permute.xlu0 %160
        %162 = vrot.lane.b32.xlu0 %v145, 127
        %v163 = vpop.permute.xlu0 %162
        %v166 = vmin.f32 %v143, %v161
        %v167 = vmin.f32 %v145, %v163
        %v168 = vmax.f32 %v143, %v161
        %v169 = vmax.f32 %v145, %v163
        %172 = vrot.lane.b32.xlu0 %v154, 127
        %v173 = vpop.permute.xlu0 %172
        %174 = vrot.lane.b32.xlu0 %v155, 127
        %v175 = vpop.permute.xlu0 %174
        %v178 = vmin.f32 %v142, %v173
        %v179 = vmin.f32 %v144, %v175
        %v180 = vmax.f32 %v142, %v173
        %v181 = vmax.f32 %v144, %v175
        %184 = vrot.lane.b32.xlu0 %v166, 127
        %v185 = vpop.permute.xlu0 %184
        %186 = vrot.lane.b32.xlu0 %v167, 127
        %v187 = vpop.permute.xlu0 %186
        %v190 = vmin.f32 %v143, %v185
        %v191 = vmin.f32 %v145, %v187
        %v192 = vmax.f32 %v143, %v185
        %v193 = vmax.f32 %v145, %v187
        %196 = vrot.lane.b32.xlu0 %v156, 127
        %v197 = vpop.permute.xlu0 %196
        %198 = vrot.lane.b32.xlu0 %v157, 127
        %v199 = vpop.permute.xlu0 %198
        %v202 = vmin.f32 %v180, %v197
        %v203 = vmin.f32 %v181, %v199
        %v204 = vmax.f32 %v180, %v197
        %v205 = vmax.f32 %v181, %v199
        %208 = vrot.lane.b32.xlu0 %v168, 127
        %v209 = vpop.permute.xlu0 %208
        %210 = vrot.lane.b32.xlu0 %v169, 127
        %v211 = vpop.permute.xlu0 %210
        %v214 = vmin.f32 %v192, %v209
        %v215 = vmin.f32 %v193, %v211
        %v216 = vmax.f32 %v192, %v209
        %v217 = vmax.f32 %v193, %v211
        %vm222 = vcmask 1046528
        %v223 = vrot.slane %v178, 1
        %v224 = vrot.slane %v190, 1
        %v225 = vsel %vm222, %v223, %v224
        %v226 = vrot.slane %v179, 1
        %v227 = vrot.slane %v191, 1
        %v228 = vsel %vm222, %v226, %v227
        %v231 = vmax.f32 %v178, %v225
        %v232 = vmax.f32 %v179, %v228
        %v237 = vrot.slane %v204, 1
        %v238 = vrot.slane %v216, 1
        %v239 = vsel %vm222, %v237, %v238
        %v240 = vrot.slane %v205, 1
        %v241 = vrot.slane %v217, 1
        %v242 = vsel %vm222, %v240, %v241
        %v247 = vmin.f32 %v204, %v239
        %v248 = vmin.f32 %v216, %v238
        %v249 = vmin.f32 %v205, %v242
        %v250 = vmin.f32 %v217, %v241
        %v255 = vrot.slane %v202, 1
        %v256 = vrot.slane %v214, 1
        %v257 = vsel %vm222, %v255, %v256
        %v258 = vrot.slane %v203, 1
        %v259 = vrot.slane %v215, 1
        %v260 = vsel %vm222, %v258, %v259
        %v265 = vmin.f32 %v202, %v257
        %v266 = vmin.f32 %v214, %v256
        %v267 = vmin.f32 %v203, %v260
        %v268 = vmin.f32 %v215, %v259
        %v269 = vmax.f32 %v202, %v257
        %v270 = vmax.f32 %v214, %v256
        %v271 = vmax.f32 %v203, %v260
        %v272 = vmax.f32 %v215, %v259
        %vm273 = vcmask 1045504
        %v274 = vrot.slane %v178, 2
        %v275 = vrot.slane %v190, 2
        %v276 = vsel %vm273, %v274, %v275
        %v277 = vrot.slane %v179, 2
        %v278 = vrot.slane %v191, 2
        %v279 = vsel %vm273, %v277, %v278
        %v282 = vmax.f32 %v231, %v276
        %v283 = vmax.f32 %v232, %v279
        %v288 = vrot.slane %v265, 1
        %v289 = vrot.slane %v266, 1
        %v290 = vsel %vm222, %v288, %v289
        %v291 = vrot.slane %v267, 1
        %v292 = vrot.slane %v268, 1
        %v293 = vsel %vm222, %v291, %v292
        %v296 = vmax.f32 %v202, %v290
        %v297 = vmax.f32 %v203, %v293
        %v302 = vrot.slane %v247, 1
        %v303 = vrot.slane %v248, 1
        %v304 = vsel %vm222, %v302, %v303
        %v305 = vrot.slane %v249, 1
        %v306 = vrot.slane %v250, 1
        %v307 = vsel %vm222, %v305, %v306
        %v310 = vmin.f32 %v204, %v304
        %v311 = vmin.f32 %v205, %v307
        %v316 = vrot.slane %v269, 1
        %v317 = vrot.slane %v270, 1
        %v318 = vsel %vm222, %v316, %v317
        %v319 = vrot.slane %v271, 1
        %v320 = vrot.slane %v272, 1
        %v321 = vsel %vm222, %v319, %v320
        %v324 = vmin.f32 %v296, %v318
        %v325 = vmin.f32 %v297, %v321
        %v326 = vmin.f32 %v324, %v310
        %v327 = vmin.f32 %v325, %v311
        %v328 = vmax.f32 %v324, %v310
        %v329 = vmax.f32 %v325, %v311
        %v330 = vmax.f32 %v282, %v326
        %v331 = vmax.f32 %v283, %v327
        %v332 = vmin.f32 %v330, %v328
        %v333 = vmin.f32 %v331, %v329
        %vm334 = vcmask 113664
        %335 = vst.msk [vmem:[%s140] sm:$0xff] %vm334, %v332
        %336 = vst.msk [vmem:[%s140 + $0x10] sm:$0xff] %vm334, %v333
        %v337 = vld [vmem:[%s114 + $0x6] sm:$0xff]
        %v338 = vld [vmem:[%s114 + $0xe] sm:$0x3]
        %v339 = vld [vmem:[%s114 + $0x16] sm:$0xff]
        %v340 = vld [vmem:[%s114 + $0x1e] sm:$0x3]
        %343 = vrot.lane.b32.xlu0 %v337, 127
        %v344 = vpop.permute.xlu0 %343
        %345 = vrot.lane.b32.xlu0 %v339, 127
        %v346 = vpop.permute.xlu0 %345
        %v349 = vmin.f32 %v337, %v344
        %v350 = vmin.f32 %v339, %v346
        %v351 = vmax.f32 %v337, %v344
        %v352 = vmax.f32 %v339, %v346
        %355 = vrot.lane.b32.xlu0 %v338, 127
        %v356 = vpop.permute.xlu0 %355
        %357 = vrot.lane.b32.xlu0 %v340, 127
        %v358 = vpop.permute.xlu0 %357
        %v361 = vmin.f32 %v338, %v356
        %v362 = vmin.f32 %v340, %v358
        %v363 = vmax.f32 %v338, %v356
        %v364 = vmax.f32 %v340, %v358
        %367 = vrot.lane.b32.xlu0 %v349, 127
        %v368 = vpop.permute.xlu0 %367
        %369 = vrot.lane.b32.xlu0 %v350, 127
        %v370 = vpop.permute.xlu0 %369
        %v373 = vmin.f32 %v337, %v368
        %v374 = vmin.f32 %v339, %v370
        %v375 = vmax.f32 %v337, %v368
        %v376 = vmax.f32 %v339, %v370
        %379 = vrot.lane.b32.xlu0 %v361, 127
        %v380 = vpop.permute.xlu0 %379
        %381 = vrot.lane.b32.xlu0 %v362, 127
        %v382 = vpop.permute.xlu0 %381
        %v385 = vmin.f32 %v338, %v380
        %v386 = vmin.f32 %v340, %v382
        %v387 = vmax.f32 %v338, %v380
        %v388 = vmax.f32 %v340, %v382
        %391 = vrot.lane.b32.xlu0 %v351, 127
        %v392 = vpop.permute.xlu0 %391
        %393 = vrot.lane.b32.xlu0 %v352, 127
        %v394 = vpop.permute.xlu0 %393
        %v397 = vmin.f32 %v375, %v392
        %v398 = vmin.f32 %v376, %v394
        %v399 = vmax.f32 %v375, %v392
        %v400 = vmax.f32 %v376, %v394
        %403 = vrot.lane.b32.xlu0 %v363, 127
        %v404 = vpop.permute.xlu0 %403
        %405 = vrot.lane.b32.xlu0 %v364, 127
        %v406 = vpop.permute.xlu0 %405
        %v409 = vmin.f32 %v387, %v404
        %v410 = vmin.f32 %v388, %v406
        %v411 = vmax.f32 %v387, %v404
        %v412 = vmax.f32 %v388, %v406
        %v417 = vrot.slane %v373, 1
        %v418 = vrot.slane %v385, 1
        %v419 = vsel %vm222, %v417, %v418
        %v420 = vrot.slane %v374, 1
        %v421 = vrot.slane %v386, 1
        %v422 = vsel %vm222, %v420, %v421
        %v425 = vmax.f32 %v373, %v419
        %v426 = vmax.f32 %v374, %v422
        %v431 = vrot.slane %v399, 1
        %v432 = vrot.slane %v411, 1
        %v433 = vsel %vm222, %v431, %v432
        %v434 = vrot.slane %v400, 1
        %v435 = vrot.slane %v412, 1
        %v436 = vsel %vm222, %v434, %v435
        %v441 = vmin.f32 %v399, %v433
        %v442 = vmin.f32 %v411, %v432
        %v443 = vmin.f32 %v400, %v436
        %v444 = vmin.f32 %v412, %v435
        %v449 = vrot.slane %v397, 1
        %v450 = vrot.slane %v409, 1
        %v451 = vsel %vm222, %v449, %v450
        %v452 = vrot.slane %v398, 1
        %v453 = vrot.slane %v410, 1
        %v454 = vsel %vm222, %v452, %v453
        %v459 = vmin.f32 %v397, %v451
        %v460 = vmin.f32 %v409, %v450
        %v461 = vmin.f32 %v398, %v454
        %v462 = vmin.f32 %v410, %v453
        %v463 = vmax.f32 %v397, %v451
        %v464 = vmax.f32 %v409, %v450
        %v465 = vmax.f32 %v398, %v454
        %v466 = vmax.f32 %v410, %v453
        %v467 = vrot.slane %v373, 2
        %v468 = vrot.slane %v385, 2
        %v469 = vsel %vm273, %v467, %v468
        %v470 = vrot.slane %v374, 2
        %v471 = vrot.slane %v386, 2
        %v472 = vsel %vm273, %v470, %v471
        %v475 = vmax.f32 %v425, %v469
        %v476 = vmax.f32 %v426, %v472
        %v481 = vrot.slane %v459, 1
        %v482 = vrot.slane %v460, 1
        %v483 = vsel %vm222, %v481, %v482
        %v484 = vrot.slane %v461, 1
        %v485 = vrot.slane %v462, 1
        %v486 = vsel %vm222, %v484, %v485
        %v489 = vmax.f32 %v397, %v483
        %v490 = vmax.f32 %v398, %v486
        %v495 = vrot.slane %v441, 1
        %v496 = vrot.slane %v442, 1
        %v497 = vsel %vm222, %v495, %v496
        %v498 = vrot.slane %v443, 1
        %v499 = vrot.slane %v444, 1
        %v500 = vsel %vm222, %v498, %v499
        %v503 = vmin.f32 %v399, %v497
        %v504 = vmin.f32 %v400, %v500
        %v509 = vrot.slane %v463, 1
        %v510 = vrot.slane %v464, 1
        %v511 = vsel %vm222, %v509, %v510
        %v512 = vrot.slane %v465, 1
        %v513 = vrot.slane %v466, 1
        %v514 = vsel %vm222, %v512, %v513
        %v517 = vmin.f32 %v489, %v511
        %v518 = vmin.f32 %v490, %v514
        %v519 = vmin.f32 %v517, %v503
        %v520 = vmin.f32 %v518, %v504
        %v521 = vmax.f32 %v517, %v503
        %v522 = vmax.f32 %v518, %v504
        %v523 = vmax.f32 %v475, %v519
        %v524 = vmax.f32 %v476, %v520
        %v525 = vmin.f32 %v523, %v521
        %v526 = vmin.f32 %v524, %v522
        %527 = vst.msk [vmem:[%s140 + $0x6] sm:$0xff] %vm334, %v525
        %528 = vst.msk [vmem:[%s140 + $0x16] sm:$0xff] %vm334, %v526
        %s529 = smul.u32 2, %s15
        %p530 = scmp.lt.s32.totalorder %s529, 7
        %s531 = scalar_select %p530, %s529, 7
        %s532 = smul.addr %s531, 2
        %s533 = smul.addr %s532, 8
        %s534 = scalar_lea.vmem %s1, %s533
        // Predicated region
        $region29: #{tpu_custom_call.1} parent=23 // pred_check
          %p535 = pneg %p59
        $region30: #{tpu_custom_call.1} parent=23 // pred_check_branch
          %537 = sbr.rel (%p535) target = $region32
        $region31: #{tpu_custom_call.1} parent=23 // pred_region
          %s538 = smul.u32 2, %s15
        $region32: #{tpu_custom_call.1} parent=23 // pred_fallthru
          _
      $region24: #{tpu_custom_call.1} parent=5 // pred_fallthru
        _
      %p539 = scmp.le.s32.totalorder 2, %s10
      // Predicated region
      $region33: #{tpu_custom_call.1} parent=5 // pred_check
        %p540 = pneg %p539
      $region34: #{tpu_custom_call.1} parent=5 // pred_check_branch
        %542 = sbr.rel (%p540) target = $region36
      $region35: #{tpu_custom_call.1} parent=5 // pred_region
        %s543 = ssub.s32 %s10, 2
        // Predicated region
        $region37: #{tpu_custom_call.1} parent=35 // pred_check
          %p544 = pneg %p65
        $region38: #{tpu_custom_call.1} parent=35 // pred_check_branch
          %546 = sbr.rel (%p544) target = $region40
        $region39: #{tpu_custom_call.1} parent=35 // pred_region
          %s547 = smul.u32 2, %s16
          %p548 = scmp.lt.s32.totalorder %s547, 7
          %s549 = scalar_select %p548, %s547, 7
          %s550 = smul.addr %s549, 2
          %s551 = smul.addr %s550, 8
          %s552 = scalar_lea.vmem %s1, %s551
        $region40: #{tpu_custom_call.1} parent=35 // pred_fallthru
          _
      $region36: #{tpu_custom_call.1} parent=5 // pred_fallthru
        _
    $region6: #{tpu_custom_call.1} parent=1 // loop_footer
      %s14 = sadd.s32 1, %s10
    $region7: #{tpu_custom_call.1} parent=1 // loop_footer_branch
      %9 = sbr.rel target = $region3
    $region8: #{tpu_custom_call.1} parent=1 // loop_exit
      _
    %553 = vsyncpa [#allocation3], 1
    %s554 = scalar_lea.sflag [#allocation3], 1
    %555 = vsyncpa %s554, 1

</llo_original>
